<compile_context>
chip_gen: v5e
topology: v5e:2x2
jax: 0.10.0
libtpu: 0.0.40
codegen_flags: <defaults>
</compile_context>

<pallas_src>
import functools
import math

import jax
import jax.numpy as jnp
from jax.experimental import pallas as pl
from jax.experimental.pallas import tpu as pltpu


def _round_up(x, m):
    return ((x + m - 1) // m) * m


def _vmem_tile_bytes(rows, cols, itemsize):
    # Conservative layout-padded size of one VMEM buffer.
    return _round_up(max(rows, 1), 16) * _round_up(max(cols, 1), 128) * itemsize


def _choose_m_tile(M):
    """Pick the M tile: large-ish, low padding waste, >=2 grid steps if possible."""
    m16 = _round_up(M, 16)
    cands = [t for t in (512, 256, 128, 64, 32, 16) if 2 * t <= m16]
    if not cands:
        return m16, m16
    max_waste = max(M // 8, 16)
    for t in cands:                       # largest first
        if _round_up(M, t) - M <= max_waste:
            return t, _round_up(M, t)
    t = min(cands, key=lambda t: _round_up(M, t) - M)
    return t, _round_up(M, t)


# ----------------------------------------------------------------------------
# Pallas kernel: one-shot (patches @ W_scaled) + bias, ReLU.  No reduction grid
# axis (K is a single full-extent block), so no accumulator / pl.when needed.
# ----------------------------------------------------------------------------
def _matmul_bias_relu_kernel(p_ref, w_ref, b_ref, o_ref):
    # p_ref: (tm, k_pad) bf16   im2col patches tile (streamed along M)
    # w_ref: (k_pad, tn) bf16   BN-scale-folded conv weight (VMEM-resident)
    # b_ref: (1,  tn)    f32    folded BN bias (VMEM-resident)
    # o_ref: (tm, tn)    out    output tile
    acc = jnp.dot(p_ref[...], w_ref[...], preferred_element_type=jnp.float32)
    o_ref[...] = jnp.maximum(acc + b_ref[...], 0.0).astype(o_ref.dtype)


def _fused_matmul_bias_relu(patches, w_scaled, bias, out_dtype=jnp.bfloat16):
    """relu(patches @ w_scaled + bias) with a weight-resident Pallas GEMM.

    patches:  (M, K)     bf16 activations / im2col rows
    w_scaled: (K, Cout)  conv weights with BN scale folded in
    bias:     (Cout,)    folded BN bias (applied in f32)
    """
    M, K = patches.shape
    Cout = w_scaled.shape[1]

    k_pad = _round_up(K, 16)              # bf16 sublane pack; NOT padded to 128
    tm, m_pad = _choose_m_tile(M)

    # N tiling only if Cout is large enough that resident weight/out tiles
    # would hurt; UHRNet transition convs always take the single-block path.
    if Cout > 1024 and Cout % 128 == 0:
        tn = 256 if Cout % 256 == 0 else 128
    else:
        tn = Cout
    n_tiles = Cout // tn

    p = patches if patches.dtype == jnp.bfloat16 else patches.astype(jnp.bfloat16)
    if (m_pad, k_pad) != (M, K):
        p = jnp.pad(p, ((0, m_pad - M), (0, k_pad - K)))
    w = w_scaled.astype(jnp.bfloat16)
    if k_pad != K:
        w = jnp.pad(w, ((0, k_pad - K), (0, 0)))
    b = bias.astype(jnp.float32).reshape(1, Cout)

    out_itemsize = jnp.dtype(out_dtype).itemsize

    if n_tiles == 1:
        grid = (m_pad // tm,)
        in_specs = [
            pl.BlockSpec((tm, k_pad), lambda i: (i, 0)),
            pl.BlockSpec((k_pad, tn), lambda i: (0, 0)),   # fetched once
            pl.BlockSpec((1, tn), lambda i: (0, 0)),       # fetched once
        ]
        out_spec = pl.BlockSpec((tm, tn), lambda i: (i, 0))
        semantics = ("parallel",)
    else:
        grid = (m_pad // tm, n_tiles)
        in_specs = [
            pl.BlockSpec((tm, k_pad), lambda i, j: (i, 0)),
            pl.BlockSpec((k_pad, tn), lambda i, j: (0, j)),
            pl.BlockSpec((1, tn), lambda i, j: (0, j)),
        ]
        out_spec = pl.BlockSpec((tm, tn), lambda i, j: (i, j))
        semantics = ("parallel", "parallel")

    # Layout-padded, double-buffered footprint -> VMEM limit (v7x <= 48 MiB).
    footprint = (2 * _vmem_tile_bytes(tm, k_pad, 2)
                 + 2 * _vmem_tile_bytes(k_pad, tn, 2)
                 + 2 * _vmem_tile_bytes(1, tn, 4)
                 + 2 * _vmem_tile_bytes(tm, tn, out_itemsize))
    vmem_limit = int(min(48 * 2**20, max(32 * 2**20, 4 * footprint)))

    cost = pl.CostEstimate(
        flops=2 * m_pad * k_pad * Cout,
        transcendentals=0,
        bytes_accessed=(p.size * 2 + w.size * 2 + b.size * 4
                        + m_pad * Cout * out_itemsize),
    )

    out = pl.pallas_call(
        _matmul_bias_relu_kernel,
        out_shape=jax.ShapeDtypeStruct((m_pad, Cout), out_dtype),
        grid_spec=pltpu.PrefetchScalarGridSpec(
            num_scalar_prefetch=0,
            grid=grid,
            in_specs=in_specs,
            out_specs=out_spec,
        ),
        compiler_params=pltpu.CompilerParams(
            dimension_semantics=semantics,
            vmem_limit_bytes=vmem_limit,
        ),
        cost_estimate=cost,
    )(p, w, b)

    return out if m_pad == M else out[:M]


# ----------------------------------------------------------------------------
# BN folding + glue (padding / im2col in plain JAX, GEMM + epilogue in Pallas).
# ----------------------------------------------------------------------------
def _fold_bn_into_weight(params, eps=1e-3):
    w = params["weight"]                       # (Cout, Cin, kh, kw), PyTorch layout
    scale = params["gamma"] / jnp.sqrt(params["running_var"] + eps)
    bias = params["beta"] - params["running_mean"] * scale
    cout, cin, kh, kw = w.shape
    w_flat = jnp.transpose(w, (2, 3, 1, 0)).reshape(kh * kw * cin, cout)
    return w_flat * scale[None, :], bias


@functools.partial(jax.jit, static_argnames=("kernel_size", "stride", "out_dtype"))
def _conv_group_nhwc(x_nhwc, w_scaled, bias, *, kernel_size, stride,
                     out_dtype=jnp.bfloat16):
    """Fused ConvBnReLU for one (kernel_size, stride) group; x_nhwc is bf16 NHWC."""
    N, H, W, Cin = x_nhwc.shape
    Cout = w_scaled.shape[1]
    kh = kw = kernel_size
    pad = (kernel_size - 1) // 2               # 'same' padding as in PyTorch module
    Hout = (H + 2 * pad - kh) // stride + 1
    Wout = (W + 2 * pad - kw) // stride + 1

    x_bf16 = x_nhwc.astype(jnp.bfloat16)       # no-op if already bf16

    if kh == 1 and kw == 1 and stride == 1 and pad == 0:
        patches = x_bf16.reshape(N * H * W, Cin)           # no im2col for 1x1/s1
    else:
        # TODO(synk): bf16 im2col is still an HBM-materialised intermediate; a
        # direct-conv Pallas kernel (manual halo DMA + per-tap strided VMEM
        # slices) would remove this extra read/write pass.
        xp = jnp.pad(x_bf16, ((0, 0), (pad, pad), (pad, pad), (0, 0)))
        chunks = [xp[:, ky:ky + Hout * stride:stride,
                     kx:kx + Wout * stride:stride, :]
                  for ky in range(kh) for kx in range(kw)]
        patches = jnp.concatenate(chunks, axis=-1).reshape(
            N * Hout * Wout, kh * kw * Cin)

    out = _fused_matmul_bias_relu(patches, w_scaled, bias, out_dtype=out_dtype)
    return out.reshape(N, Hout, Wout, Cout)


def conv_bn_relu(x_nchw, params, *, kernel_size, stride, eps=1e-3):
    """Standalone NCHW ConvBnReLU (PyTorch layout) for a single branch."""
    w_scaled, bias = _fold_bn_into_weight(params, eps=eps)
    x_nhwc = jnp.transpose(x_nchw, (0, 2, 3, 1)).astype(jnp.bfloat16)
    out = _conv_group_nhwc(x_nhwc, w_scaled, bias,
                           kernel_size=kernel_size, stride=stride)
    return jnp.transpose(out, (0, 3, 1, 2)).astype(jnp.float32)


# ----------------------------------------------------------------------------
# TransitionLayer
# ----------------------------------------------------------------------------
class TransitionLayer:
    def __init__(self, stride_pre, in_channel, stride_cur, out_channels,
                 align_corners=False, key=None):
        if len(out_channels) != len(stride_cur):
            raise ValueError(
                "The length of `out_channels` does not equal the length of `stride_cur`")
        self.align_corners = align_corners
        self.branches = []      # list of None or (params, kernel_size, stride)
        if key is None:
            key = jax.random.PRNGKey(0)

        for i in range(len(out_channels)):
            cout = out_channels[i]
            if stride_cur[i] == stride_pre:
                if in_channel != cout:
                    ksize, stride = 3, 1
                else:
                    self.branches.append(None)
                    continue
            elif stride_cur[i] > stride_pre:
                ksize, stride = 3, 2
            else:
                ksize, stride = 1, 1

            key, kw_, kg, kb, km, kv = jax.random.split(key, 6)
            fan_in = in_channel * ksize * ksize
            bound = 1.0 / math.sqrt(fan_in)
            params = {
                "weight": jax.random.uniform(
                    kw_, (cout, in_channel, ksize, ksize),
                    minval=-bound, maxval=bound, dtype=jnp.float32),
                "gamma": jax.random.uniform(kg, (cout,), minval=0.5, maxval=1.5,
                                            dtype=jnp.float32),
                "beta": jax.random.normal(kb, (cout,), dtype=jnp.float32) * 0.1,
                "running_mean": jax.random.normal(km, (cout,), dtype=jnp.float32) * 0.1,
                "running_var": jax.random.uniform(kv, (cout,), minval=0.5, maxval=1.5,
                                                  dtype=jnp.float32),
            }
            self.branches.append((params, ksize, stride))

    def __call__(self, x, shape=None):
        # One shared NCHW -> bf16 NHWC conversion for all conv branches.
        x_nhwc = jnp.transpose(x, (0, 2, 3, 1)).astype(jnp.bfloat16)

        outs = [None] * len(self.branches)

        # Group conv branches by (kernel_size, stride) and fuse each group into
        # a single GEMM (concat BN-folded weights/biases along Cout).
        groups = {}
        for idx, branch in enumerate(self.branches):
            if branch is None:
                outs[idx] = x
            else:
                _, ksize, stride = branch
                groups.setdefault((ksize, stride), []).append(idx)

        for (ksize, stride), idxs in groups.items():
            w_list, b_list, couts = [], [], []
            for idx in idxs:
                params = self.branches[idx][0]
                w_s, b_s = _fold_bn_into_weight(params, eps=1e-3)
                w_list.append(w_s)
                b_list.append(b_s)
                couts.append(int(b_s.shape[0]))
            w_cat = w_list[0] if len(w_list) == 1 else jnp.concatenate(w_list, axis=1)
            b_cat = b_list[0] if len(b_list) == 1 else jnp.concatenate(b_list)

            out_nhwc = _conv_group_nhwc(x_nhwc, w_cat, b_cat,
                                        kernel_size=ksize, stride=stride)

            start = 0
            for idx, c in zip(idxs, couts):
                o = out_nhwc[..., start:start + c]
                start += c
                if shape is not None:
                    if self.align_corners:
                        # TODO(synk): align_corners=True bilinear resize not implemented.
                        raise NotImplementedError(
                            "align_corners=True bilinear resize not implemented")
                    # TODO(synk): bilinear resize is plain JAX (jax.image.resize),
                    # not a Pallas kernel.
                    o = jax.image.resize(
                        o.astype(jnp.float32),
                        (o.shape[0], shape[0], shape[1], o.shape[3]),
                        method="bilinear")
                outs[idx] = jnp.transpose(o, (0, 3, 1, 2)).astype(jnp.float32)
        return outs


# ----------------------------------------------------------------------------
# Reference (plain JAX/XLA, f32) for correctness check.
# ----------------------------------------------------------------------------
def _ref_conv_bn_relu(x_nchw, params, *, kernel_size, stride, eps=1e-3):
    pad = (kernel_size - 1) // 2
    y = jax.lax.conv_general_dilated(
        x_nchw, params["weight"], window_strides=(stride, stride),
        padding=((pad, pad), (pad, pad)),
        dimension_numbers=("NCHW", "OIHW", "NCHW"))
    scale = params["gamma"] / jnp.sqrt(params["running_var"] + eps)
    bias = params["beta"] - params["running_mean"] * scale
    y = y * scale[None, :, None, None] + bias[None, :, None, None]
    return jnp.maximum(y, 0.0)


if __name__ == "__main__":
    key = jax.random.PRNGKey(0)
    kx, kp = jax.random.split(key)

    # small shapes: batch=2, channels=4, spatial=16
    x = jax.random.normal(kx, (2, 4, 16, 16), dtype=jnp.float32)

    # Exercise all branch types:
    #   branch 0: same stride, channel change  -> 3x3, stride 1
    #   branch 1: stride_cur > stride_pre      -> 3x3, stride 2
    #   branch 2: stride_cur < stride_pre      -> 1x1, stride 1
    #   branch 3: same stride, same channels   -> identity (None)
    layer = TransitionLayer(stride_pre=4, in_channel=4,
                            stride_cur=[4, 8, 2, 4],
                            out_channels=[8, 8, 8, 4],
                            key=kp)

    outs = layer(x)
    for o in outs:
        jax.block_until_ready(o)

    expected_shapes = [(2, 8, 16, 16), (2, 8, 8, 8), (2, 8, 16, 16), (2, 4, 16, 16)]
    for o, s in zip(outs, expected_shapes):
        assert o.shape == s, (o.shape, s)

    # Sanity check against plain-JAX f32 reference (bf16 MXU path -> relaxed tol).
    for i, branch in enumerate(layer.branches):
        if branch is None:
            assert jnp.allclose(outs[i], x)
        else:
            params, ksize, stride = branch
            ref = _ref_conv_bn_relu(x, params, kernel_size=ksize, stride=stride)
            assert jnp.allclose(outs[i], ref, rtol=5e-2, atol=5e-2), \
                f"branch {i} mismatch: max err = {jnp.max(jnp.abs(outs[i] - ref))}"

    print("KERNEL_OK")
</pallas_src>

<mosaic_0001>
module attributes {stable_mosaic.version = 11 : i64} {
  func.func @_matmul_bias_relu_kernel(%arg0: i32, %arg1: memref<256x48xbf16, #tpu.memory_space<vmem>>, %arg2: memref<48x8xbf16, #tpu.memory_space<vmem>>, %arg3: memref<1x8xf32, #tpu.memory_space<vmem>>, %arg4: memref<256x8xbf16, #tpu.memory_space<vmem>>) attributes {dimension_semantics = [#tpu.dimension_semantics<parallel>], iteration_bounds = array<i64: 2>, scalar_prefetch = 0 : i64, scratch_operands = 0 : i64, tpu.core_type = #tpu.core_type<tc>, window_params = [{transform_indices = @transform_0, window_bounds = array<i64: 256, 48>}, {pipeline_mode = #tpu.pipeline_mode<synchronous>, transform_indices = @transform_1, window_bounds = array<i64: 48, 8>}, {pipeline_mode = #tpu.pipeline_mode<synchronous>, transform_indices = @transform_2, window_bounds = array<i64: 1, 8>}, {transform_indices = @transform_3, window_bounds = array<i64: 256, 8>}]} {
    %c0 = arith.constant 0 : index
    %c0_0 = arith.constant 0 : index
    %0 = vector.load %arg1[%c0, %c0_0] : memref<256x48xbf16, #tpu.memory_space<vmem>>, vector<256x48xbf16>
    %c0_1 = arith.constant 0 : index
    %c0_2 = arith.constant 0 : index
    %1 = vector.load %arg2[%c0_1, %c0_2] : memref<48x8xbf16, #tpu.memory_space<vmem>>, vector<48x8xbf16>
    %cst = arith.constant dense<0.000000e+00> : vector<256x8xf32>
    %2 = tpu.matmul %0, %1, %cst {dimension_numbers = #tpu.dot_dimension_numbers<[1], [0], [0], [1], [0, 0, 1, 1], [], []>} : vector<256x48xbf16>, vector<48x8xbf16>, vector<256x8xf32> -> vector<256x8xf32>
    %c0_3 = arith.constant 0 : index
    %c0_4 = arith.constant 0 : index
    %3 = vector.load %arg3[%c0_3, %c0_4] : memref<1x8xf32, #tpu.memory_space<vmem>>, vector<1x8xf32>
    %4 = vector.broadcast %3 : vector<1x8xf32> to vector<256x8xf32>
    %5 = arith.addf %2, %4 : vector<256x8xf32>
    %cst_5 = arith.constant 0.000000e+00 : f32
    %6 = vector.broadcast %cst_5 : f32 to vector<256x8xf32>
    %7 = arith.maximumf %5, %6 : vector<256x8xf32>
    %8 = arith.truncf %7 : vector<256x8xf32> to vector<256x8xbf16>
    %c0_6 = arith.constant 0 : index
    %c0_7 = arith.constant 0 : index
    %9 = vector.load %arg4[%c0_6, %c0_7] : memref<256x8xbf16, #tpu.memory_space<vmem>>, vector<256x8xbf16>
    tpu.vector_store %arg4[%c0_6, %c0_7], %8 {strides = array<i32>} : memref<256x8xbf16, #tpu.memory_space<vmem>>, vector<256x8xbf16>,
    return
  }
  func.func @transform_0(%arg0: i32) -> (i32, i32) {
    %c0_i32 = arith.constant 0 : i32
    %c0_i32_0 = arith.constant 0 : i32
    return %arg0, %c0_i32 : i32, i32
  }
  func.func @transform_1(%arg0: i32) -> (i32, i32) {
    %c0_i32 = arith.constant 0 : i32
    %c0_i32_0 = arith.constant 0 : i32
    %c0_i32_1 = arith.constant 0 : i32
    return %c0_i32, %c0_i32_0 : i32, i32
  }
  func.func @transform_2(%arg0: i32) -> (i32, i32) {
    %c0_i32 = arith.constant 0 : i32
    %c0_i32_0 = arith.constant 0 : i32
    %c0_i32_1 = arith.constant 0 : i32
    return %c0_i32, %c0_i32_0 : i32, i32
  }
  func.func @transform_3(%arg0: i32) -> (i32, i32) {
    %c0_i32 = arith.constant 0 : i32
    %c0_i32_0 = arith.constant 0 : i32
    return %arg0, %c0_i32 : i32, i32
  }
}

</mosaic_0001>

<llo_original>
// kernel: _conv_group_nhwc.1
$region0: #{_conv_group_nhwc.1}
  #allocation0 [shape = 'u32[]', space=smem, size = 0x4, offset = 0x4, fixed_abs, tag = 'smem constant byte address 0x4 - core index']
  #allocation1 [shape = 'u32[72,128]{1,0:T(1,128)}', space=vmem, size = 0x9000, scoped, tag = 'internal scratch']
  %s0 = inlined_call_operand.vmem [shape: bf16[512,48], index: 0, kind: input, shape index: {}]
  %s1 = inlined_call_operand.vmem [shape: bf16[48,8], index: 1, kind: input, shape index: {}]
  %s2 = inlined_call_operand.vmem [shape: f32[1,8], index: 2, kind: input, shape index: {}]
  %s3 = inlined_call_operand.vmem [shape: bf16[512,8], index: 3, kind: output, shape index: {}]
  %s4 = sld [smem:[#allocation0]]
  $region45: #{_conv_group_nhwc.1} parent=0
    _
  %s6 = ssub.s32 1, %s4
  %s7 = scalar_select 0, %s6, %s4
  loop: start=0, step=1, limit=4
  $region2: #{_conv_group_nhwc.1} parent=0 // loop_pre_header
    _
  $region3: #{_conv_group_nhwc.1} parent=0 // loop_header
    %s9 = sphi 0, %s13
    %p10 = scmp.ge.s32.totalorder %s9, 4
    %s19 = sphi 0, %s21
    %s22 = sphi 0, %s19
    %s23 = sphi 0, %s22
    %s39 = sphi 0, %s23
    %s43 = sphi 0, %s43
    %s45 = sphi 0, %s43
    %s46 = sphi 0, %s45
    %s60 = sphi 0, %s46
    %s64 = sphi 0, %s64
    %s66 = sphi 0, %s64
    %s67 = sphi 0, %s66
    %s81 = sphi 0, %s67
    %s87 = sphi 0, %s89
    %s90 = sphi 0, %s87
    %s91 = sphi 0, %s90
    %s107 = sphi 0, %s91
  $region4: #{_conv_group_nhwc.1} parent=0 // loop_header_branch
    %12 = sbr.rel (%p10) target = $region8
  $region5: #{_conv_group_nhwc.1} parent=0 // loop_body
    %s14 = ssub.s32 %s9, 1
    %s15 = ssub.s32 %s9, 2
    %s16 = sadd.s32 %s9, 1
    %s17 = ssub.s32 %s9, %s16
    %p18 = scmp.eq.s32.totalorder %s17, 0
    %s20 = sadd.s32 %s19, 1
    %s21 = scalar_select %p18, %s19, %s20
    %p24 = pneg %p18
    %p25 = scmp.eq.s32.totalorder %s9, 1
    %p26 = por %p24, %p25
    %p27 = scmp.ne.s32.totalorder %s19, %s22
    %p28 = scmp.eq.s32.totalorder %s9, 0
    %p29 = por %p27, %p28
    %p30 = scmp.ne.s32.totalorder %s19, %s22
    %p31 = scmp.eq.s32.totalorder %s14, 1
    %p32 = por %p30, %p31
    %p33 = scmp.ne.s32.totalorder %s22, %s23
    %p34 = scmp.eq.s32.totalorder %s14, 0
    %p35 = por %p33, %p34
    %p36 = scmp.ne.s32.totalorder %s22, %s23
    %p37 = scmp.eq.s32.totalorder %s15, 1
    %p38 = por %p36, %p37
    %p40 = scmp.ne.s32.totalorder %s23, %s39
    %p41 = scmp.eq.s32.totalorder %s15, 0
    %p42 = por %p40, %p41
    %s44 = sadd.s32 %s43, 1
    %p47 = scmp.eq.s32.totalorder %s9, 1
    %p48 = scmp.ne.s32.totalorder %s43, %s45
    %p49 = scmp.eq.s32.totalorder %s9, 0
    %p50 = por %p48, %p49
    %p51 = scmp.ne.s32.totalorder %s43, %s45
    %p52 = scmp.eq.s32.totalorder %s14, 1
    %p53 = por %p51, %p52
    %p54 = scmp.ne.s32.totalorder %s45, %s46
    %p55 = scmp.eq.s32.totalorder %s14, 0
    %p56 = por %p54, %p55
    %p57 = scmp.ne.s32.totalorder %s45, %s46
    %p58 = scmp.eq.s32.totalorder %s15, 1
    %p59 = por %p57, %p58
    %p61 = scmp.ne.s32.totalorder %s46, %s60
    %p62 = scmp.eq.s32.totalorder %s15, 0
    %p63 = por %p61, %p62
    %s65 = sadd.s32 %s64, 1
    %p68 = scmp.eq.s32.totalorder %s9, 1
    %p69 = scmp.ne.s32.totalorder %s64, %s66
    %p70 = scmp.eq.s32.totalorder %s9, 0
    %p71 = por %p69, %p70
    %p72 = scmp.ne.s32.totalorder %s64, %s66
    %p73 = scmp.eq.s32.totalorder %s14, 1
    %p74 = por %p72, %p73
    %p75 = scmp.ne.s32.totalorder %s66, %s67
    %p76 = scmp.eq.s32.totalorder %s14, 0
    %p77 = por %p75, %p76
    %p78 = scmp.ne.s32.totalorder %s66, %s67
    %p79 = scmp.eq.s32.totalorder %s15, 1
    %p80 = por %p78, %p79
    %p82 = scmp.ne.s32.totalorder %s67, %s81
    %p83 = scmp.eq.s32.totalorder %s15, 0
    %p84 = por %p82, %p83
    %s85 = ssub.s32 %s9, %s16
    %p86 = scmp.eq.s32.totalorder %s85, 0
    %s88 = sadd.s32 %s87, 1
    %s89 = scalar_select %p86, %s87, %s88
    %p92 = pneg %p86
    %p93 = scmp.eq.s32.totalorder %s9, 1
    %p94 = por %p92, %p93
    %p95 = scmp.ne.s32.totalorder %s87, %s90
    %p96 = scmp.eq.s32.totalorder %s9, 0
    %p97 = por %p95, %p96
    %p98 = scmp.ne.s32.totalorder %s87, %s90
    %p99 = scmp.eq.s32.totalorder %s14, 1
    %p100 = por %p98, %p99
    %p101 = scmp.ne.s32.totalorder %s90, %s91
    %p102 = scmp.eq.s32.totalorder %s14, 0
    %p103 = por %p101, %p102
    %p104 = scmp.ne.s32.totalorder %s90, %s91
    %p105 = scmp.eq.s32.totalorder %s15, 1
    %p106 = por %p104, %p105
    %p108 = scmp.ne.s32.totalorder %s91, %s107
    %p109 = scmp.eq.s32.totalorder %s15, 0
    %p110 = por %p108, %p109
    %p111 = scmp.le.s32.totalorder 1, %s9
    %p112 = scmp.lt.s32.totalorder %s9, 3
    %p113 = pnand %p111, %p112
    %p114 = pneg %p113
    // Predicated region
    $region9: #{_conv_group_nhwc.1} parent=5 // pred_check
      _
    $region10: #{_conv_group_nhwc.1} parent=5 // pred_check_branch
      %116 = sbr.rel (%p113) target = $region12
    $region11: #{_conv_group_nhwc.1} parent=5 // pred_region
      %s117 = ssub.s32 %s9, 1
      // Predicated region
      $region13: #{_conv_group_nhwc.1} parent=11 // pred_check
        %p118 = pneg %p56
      $region14: #{_conv_group_nhwc.1} parent=11 // pred_check_branch
        %120 = sbr.rel (%p118) target = $region16
      $region15: #{_conv_group_nhwc.1} parent=11 // pred_region
        _
      $region16: #{_conv_group_nhwc.1} parent=11 // pred_fallthru
        _
      // Predicated region
      $region17: #{_conv_group_nhwc.1} parent=11 // pred_check
        %p121 = pneg %p77
      $region18: #{_conv_group_nhwc.1} parent=11 // pred_check_branch
        %123 = sbr.rel (%p121) target = $region20
      $region19: #{_conv_group_nhwc.1} parent=11 // pred_region
        _
      $region20: #{_conv_group_nhwc.1} parent=11 // pred_fallthru
        _
    $region12: #{_conv_group_nhwc.1} parent=5 // pred_fallthru
      _
    %p124 = scmp.lt.s32.totalorder %s9, 2
    // Predicated region
    $region21: #{_conv_group_nhwc.1} parent=5 // pred_check
      %p125 = pneg %p124
    $region22: #{_conv_group_nhwc.1} parent=5 // pred_check_branch
      %127 = sbr.rel (%p125) target = $region24
    $region23: #{_conv_group_nhwc.1} parent=5 // pred_region
      // Predicated region
      $region25: #{_conv_group_nhwc.1} parent=23 // pred_check
        %p128 = pneg %p29
      $region26: #{_conv_group_nhwc.1} parent=23 // pred_check_branch
        %130 = sbr.rel (%p128) target = $region28
      $region27: #{_conv_group_nhwc.1} parent=23 // pred_region
        %s131 = smul.u32 32, %s9
        %p132 = scmp.lt.s32.totalorder %s131, 63
        %s133 = scalar_select %p132, %s131, 63
        %s134 = smul.addr %s133, 4
        %s135 = scalar_lea.vmem %s0, %s134
        %s136 = smul.u32 32, %s9
      $region28: #{_conv_group_nhwc.1} parent=23 // pred_fallthru
        _
    $region24: #{_conv_group_nhwc.1} parent=5 // pred_fallthru
      _
    %p137 = scmp.le.s32.totalorder 1, %s9
    %p138 = scmp.lt.s32.totalorder %s9, 3
    %p139 = pnand %p137, %p138
    %p140 = pneg %p139
    // Predicated region
    $region29: #{_conv_group_nhwc.1} parent=5 // pred_check
      _
    $region30: #{_conv_group_nhwc.1} parent=5 // pred_check_branch
      %142 = sbr.rel (%p139) target = $region32
    $region31: #{_conv_group_nhwc.1} parent=5 // pred_region
      %s143 = ssub.s32 %s9, 1
      %s144 = smul.u32 32, %s14
      %p145 = scmp.lt.s32.totalorder %s144, 63
      %s146 = scalar_select %p145, %s144, 63
      %s147 = smul.addr %s146, 4
      %s148 = scalar_lea.vmem %s0, %s147
      %p149 = pneg %p35
      %p150 = pneg %p32
      %p151 = pneg %p56
      %p152 = pneg %p53
      %p153 = pneg %p77
      %p154 = pneg %p74
      %p155 = pneg %p103
      %p156 = pneg %p100
      %s157 = smul.u32 32, %s14
      %p158 = scmp.lt.s32.totalorder %s157, 63
      %s159 = scalar_select %p158, %s157, 63
      %s160 = smul.addr %s159, 4
      %s161 = scalar_lea.vmem %s3, %s160
      %s162 = smul.u32 32, %s14
      %p163 = scmp.lt.s32.totalorder %s162, 63
      %s164 = scalar_select %p163, %s162, 63
      %s165 = smul.addr %s164, 4
      %s166 = scalar_lea.vmem %s0, %s165
      %s167 = smul.u32 32, %s14
      %s168 = smul.u32 32, %s14
      %p169 = scmp.lt.s32.totalorder %s168, 63
      %s170 = scalar_select %p169, %s168, 63
      %s171 = smul.addr %s170, 4
      %s172 = scalar_lea.vmem %s3, %s171
      %s173 = smul.u32 32, %s14
      %v175 = vld [vmem:[%s166] sm:$0xf]
      %v176 = vld [vmem:[%s166 + $0x4] sm:$0xf]
      %v177 = vld [vmem:[%s166 + $0x8] sm:$0xf]
      %v178 = vld [vmem:[%s166 + $0xc] sm:$0xf]
      %v179 = vld [vmem:[%s166 + $0x10] sm:$0xf]
      %v180 = vld [vmem:[%s166 + $0x14] sm:$0xf]
      %v181 = vld [vmem:[%s166 + $0x18] sm:$0xf]
      %v182 = vld [vmem:[%s166 + $0x1c] sm:$0xf]
      %v183 = vld [vmem:[%s166 + $0x20] sm:$0xf]
      %v184 = vld [vmem:[%s166 + $0x24] sm:$0xf]
      %v185 = vld [vmem:[%s166 + $0x28] sm:$0xf]
      %v186 = vld [vmem:[%s166 + $0x2c] sm:$0xf]
      %v187 = vld [vmem:[%s166 + $0x30] sm:$0xf]
      %v188 = vld [vmem:[%s166 + $0x34] sm:$0xf]
      %v189 = vld [vmem:[%s166 + $0x38] sm:$0xf]
      %v190 = vld [vmem:[%s166 + $0x3c] sm:$0xf]
      %v191 = vld [vmem:[%s166 + $0x40] sm:$0xf]
      %v192 = vld [vmem:[%s166 + $0x44] sm:$0xf]
      %v193 = vld [vmem:[%s166 + $0x48] sm:$0xf]
      %v194 = vld [vmem:[%s166 + $0x4c] sm:$0xf]
      %v195 = vld [vmem:[%s166 + $0x50] sm:$0xf]
      %v196 = vld [vmem:[%s166 + $0x54] sm:$0xf]
      %v197 = vld [vmem:[%s166 + $0x58] sm:$0xf]
      %v198 = vld [vmem:[%s166 + $0x5c] sm:$0xf]
      %v199 = vld [vmem:[%s166 + $0x60] sm:$0xf]
      %v200 = vld [vmem:[%s166 + $0x64] sm:$0xf]
      %v201 = vld [vmem:[%s166 + $0x68] sm:$0xf]
      %v202 = vld [vmem:[%s166 + $0x6c] sm:$0xf]
      %v203 = vld [vmem:[%s166 + $0x70] sm:$0xf]
      %v204 = vld [vmem:[%s166 + $0x74] sm:$0xf]
      %v205 = vld [vmem:[%s166 + $0x78] sm:$0xf]
      %v206 = vld [vmem:[%s166 + $0x7c] sm:$0xf]
      %v207 = vld [vmem:[%s1] sm:$0xf]
      %v208 = vld [vmem:[%s1 + $0x4] sm:$0xf]
      %v209 = vld [vmem:[%s1 + $0x8] sm:$0xf]
      %v210 = vld [vmem:[%s1 + $0xc] sm:$0xf]
      %v211 = vld [vmem:[%s1 + $0x10] sm:$0xf]
      %v212 = vld [vmem:[%s1 + $0x14] sm:$0xf]
      %v213 = vld [vmem:[%s2] sm:$0x1]
      %v215 = vperm.slane %v213, 0
      %v249 = vunpack.c.l.b16 %v175
      %v250 = vunpack.c.l.b16 %v176
      %v251 = vunpack.c.l.b16 %v177
      %v252 = vunpack.c.l.b16 %v178
      %v253 = vunpack.c.l.b16 %v179
      %v254 = vunpack.c.l.b16 %v180
      %v255 = vunpack.c.l.b16 %v181
      %v256 = vunpack.c.l.b16 %v182
      %v257 = vunpack.c.l.b16 %v183
      %v258 = vunpack.c.l.b16 %v184
      %v259 = vunpack.c.l.b16 %v185
      %v260 = vunpack.c.l.b16 %v186
      %v261 = vunpack.c.l.b16 %v187
      %v262 = vunpack.c.l.b16 %v188
      %v263 = vunpack.c.l.b16 %v189
      %v264 = vunpack.c.l.b16 %v190
      %v265 = vunpack.c.l.b16 %v191
      %v266 = vunpack.c.l.b16 %v192
      %v267 = vunpack.c.l.b16 %v193
      %v268 = vunpack.c.l.b16 %v194
      %v269 = vunpack.c.l.b16 %v195
      %v270 = vunpack.c.l.b16 %v196
      %v271 = vunpack.c.l.b16 %v197
      %v272 = vunpack.c.l.b16 %v198
      %v273 = vunpack.c.l.b16 %v199
      %v274 = vunpack.c.l.b16 %v200
      %v275 = vunpack.c.l.b16 %v201
      %v276 = vunpack.c.l.b16 %v202
      %v277 = vunpack.c.l.b16 %v203
      %v278 = vunpack.c.l.b16 %v204
      %v279 = vunpack.c.l.b16 %v205
      %v280 = vunpack.c.l.b16 %v206
      %v281 = vpack.c.b16 %v250, %v249
      %v282 = vpack.c.b16 %v252, %v251
      %v283 = vpack.c.b16 %v254, %v253
      %v284 = vpack.c.b16 %v256, %v255
      %v285 = vpack.c.b16 %v258, %v257
      %v286 = vpack.c.b16 %v260, %v259
      %v287 = vpack.c.b16 %v262, %v261
      %v288 = vpack.c.b16 %v264, %v263
      %v289 = vpack.c.b16 %v266, %v265
      %v290 = vpack.c.b16 %v268, %v267
      %v291 = vpack.c.b16 %v270, %v269
      %v292 = vpack.c.b16 %v272, %v271
      %v293 = vpack.c.b16 %v274, %v273
      %v294 = vpack.c.b16 %v276, %v275
      %v295 = vpack.c.b16 %v278, %v277
      %v296 = vpack.c.b16 %v280, %v279
      %v303 = vunpack.c.l.b16 %v207
      %v304 = vunpack.c.l.b16 %v208
      %v305 = vunpack.c.l.b16 %v209
      %v306 = vunpack.c.l.b16 %v210
      %v307 = vunpack.c.l.b16 %v211
      %v308 = vunpack.c.l.b16 %v212
      %v309 = vpack.c.b16 %v304, %v303
      %v310 = vpack.c.b16 %v306, %v305
      %v311 = vpack.c.b16 %v308, %v307
      %vm315 = vcmask 392192
      %v317 = vsel %vm315, %v281, 0
      %v320 = vsel %vm315, %v282, 0
      %v323 = vsel %vm315, %v283, 0
      %v326 = vsel %vm315, %v284, 0
      %v329 = vsel %vm315, %v285, 0
      %v332 = vsel %vm315, %v286, 0
      %v335 = vsel %vm315, %v287, 0
      %v338 = vsel %vm315, %v288, 0
      %v341 = vsel %vm315, %v289, 0
      %v344 = vsel %vm315, %v290, 0
      %v347 = vsel %vm315, %v291, 0
      %v350 = vsel %vm315, %v292, 0
      %v353 = vsel %vm315, %v293, 0
      %v356 = vsel %vm315, %v294, 0
      %v359 = vsel %vm315, %v295, 0
      %v362 = vsel %vm315, %v296, 0
      %364 = vmatpush.bf16.msra.mxu0 0
      %365 = vmatpush.bf16.msra.mxu0 0
      %366 = vmatpush.bf16.msra.mxu0 0
      %367 = vmatpush.bf16.msra.mxu0 0
      %368 = vmatpush.bf16.msra.mxu0 0
      %369 = vmatpush.bf16.msra.mxu0 %v311
      %370 = vmatpush.bf16.msra.mxu0 %v310
      %371 = vmatpush.bf16.msra.mxu0 %v309
      %372 = vmatmul.bf16.gmra.mxu0 %v317
      %v373 = vpop.f32.mrf.mxu0
      %v374 = vadd.f32 %v215, %v373
      %v375 = vpop.f32.mrf.mxu0
      %v376 = vadd.f32 %v215, %v375
      %377 = vmatmul.bf16.gmra.mxu0 %v320
      %v378 = vpop.f32.mrf.mxu0
      %v379 = vadd.f32 %v215, %v378
      %v380 = vpop.f32.mrf.mxu0
      %v381 = vadd.f32 %v215, %v380
      %382 = vmatmul.bf16.gmra.mxu0 %v323
      %v383 = vpop.f32.mrf.mxu0
      %v384 = vadd.f32 %v215, %v383
      %v385 = vpop.f32.mrf.mxu0
      %v386 = vadd.f32 %v215, %v385
      %387 = vmatmul.bf16.gmra.mxu0 %v326
      %v388 = vpop.f32.mrf.mxu0
      %v389 = vadd.f32 %v215, %v388
      %v390 = vpop.f32.mrf.mxu0
      %v391 = vadd.f32 %v215, %v390
      %392 = vmatmul.bf16.gmra.mxu0 %v329
      %v393 = vpop.f32.mrf.mxu0
      %v394 = vadd.f32 %v215, %v393
      %v395 = vpop.f32.mrf.mxu0
      %v396 = vadd.f32 %v215, %v395
      %397 = vmatmul.bf16.gmra.mxu0 %v332
      %v398 = vpop.f32.mrf.mxu0
      %v399 = vadd.f32 %v215, %v398
      %v400 = vpop.f32.mrf.mxu0
      %v401 = vadd.f32 %v215, %v400
      %402 = vmatmul.bf16.gmra.mxu0 %v335
      %v403 = vpop.f32.mrf.mxu0
      %v404 = vadd.f32 %v215, %v403
      %v405 = vpop.f32.mrf.mxu0
      %v406 = vadd.f32 %v215, %v405
      %407 = vmatmul.bf16.gmra.mxu0 %v338
      %v408 = vpop.f32.mrf.mxu0
      %v409 = vadd.f32 %v215, %v408
      %v410 = vpop.f32.mrf.mxu0
      %v411 = vadd.f32 %v215, %v410
      %412 = vmatmul.bf16.gmra.mxu0 %v341
      %v413 = vpop.f32.mrf.mxu0
      %v414 = vadd.f32 %v215, %v413
      %v415 = vpop.f32.mrf.mxu0
      %v416 = vadd.f32 %v215, %v415
      %417 = vmatmul.bf16.gmra.mxu0 %v344
      %v418 = vpop.f32.mrf.mxu0
      %v419 = vadd.f32 %v215, %v418
      %v420 = vpop.f32.mrf.mxu0
      %v421 = vadd.f32 %v215, %v420
      %422 = vmatmul.bf16.gmra.mxu0 %v347
      %v423 = vpop.f32.mrf.mxu0
      %v424 = vadd.f32 %v215, %v423
      %v425 = vpop.f32.mrf.mxu0
      %v426 = vadd.f32 %v215, %v425
      %427 = vmatmul.bf16.gmra.mxu0 %v350
      %v428 = vpop.f32.mrf.mxu0
      %v429 = vadd.f32 %v215, %v428
      %v430 = vpop.f32.mrf.mxu0
      %v431 = vadd.f32 %v215, %v430
      %432 = vmatmul.bf16.gmra.mxu0 %v353
      %v433 = vpop.f32.mrf.mxu0
      %v434 = vadd.f32 %v215, %v433
      %v435 = vpop.f32.mrf.mxu0
      %v436 = vadd.f32 %v215, %v435
      %437 = vmatmul.bf16.gmra.mxu0 %v356
      %v438 = vpop.f32.mrf.mxu0
      %v439 = vadd.f32 %v215, %v438
      %v440 = vpop.f32.mrf.mxu0
      %v441 = vadd.f32 %v215, %v440
      %442 = vmatmul.bf16.gmra.mxu0 %v359
      %v443 = vpop.f32.mrf.mxu0
      %v444 = vadd.f32 %v215, %v443
      %v445 = vpop.f32.mrf.mxu0
      %v446 = vadd.f32 %v215, %v445
      %447 = vmatmul.bf16.gmra.mxu0 %v362
      %v448 = vpop.f32.mrf.mxu0
      %v449 = vadd.f32 %v215, %v448
      %v450 = vpop.f32.mrf.mxu0
      %v451 = vadd.f32 %v215, %v450
      %452 = vdwg.mxu0
      %v453 = vmax.f32 %v374, 0.0
      %v454 = vmax.f32 %v376, 0.0
      %v455 = vmax.f32 %v379, 0.0
      %v456 = vmax.f32 %v381, 0.0
      %v457 = vmax.f32 %v384, 0.0
      %v458 = vmax.f32 %v386, 0.0
      %v459 = vmax.f32 %v389, 0.0
      %v460 = vmax.f32 %v391, 0.0
      %v461 = vmax.f32 %v394, 0.0
      %v462 = vmax.f32 %v396, 0.0
      %v463 = vmax.f32 %v399, 0.0
      %v464 = vmax.f32 %v401, 0.0
      %v465 = vmax.f32 %v404, 0.0
      %v466 = vmax.f32 %v406, 0.0
      %v467 = vmax.f32 %v409, 0.0
      %v468 = vmax.f32 %v411, 0.0
      %v469 = vmax.f32 %v414, 0.0
      %v470 = vmax.f32 %v416, 0.0
      %v471 = vmax.f32 %v419, 0.0
      %v472 = vmax.f32 %v421, 0.0
      %v473 = vmax.f32 %v424, 0.0
      %v474 = vmax.f32 %v426, 0.0
      %v475 = vmax.f32 %v429, 0.0
      %v476 = vmax.f32 %v431, 0.0
      %v477 = vmax.f32 %v434, 0.0
      %v478 = vmax.f32 %v436, 0.0
      %v479 = vmax.f32 %v439, 0.0
      %v480 = vmax.f32 %v441, 0.0
      %v481 = vmax.f32 %v444, 0.0
      %v482 = vmax.f32 %v446, 0.0
      %v483 = vmax.f32 %v449, 0.0
      %v484 = vmax.f32 %v451, 0.0
      %v485 = vpack.c.bf16 %v453, %v453
      %v486 = vpack.c.bf16 %v454, %v454
      %v487 = vpack.c.bf16 %v455, %v455
      %v488 = vpack.c.bf16 %v456, %v456
      %v489 = vpack.c.bf16 %v457, %v457
      %v490 = vpack.c.bf16 %v458, %v458
      %v491 = vpack.c.bf16 %v459, %v459
      %v492 = vpack.c.bf16 %v460, %v460
      %v493 = vpack.c.bf16 %v461, %v461
      %v494 = vpack.c.bf16 %v462, %v462
      %v495 = vpack.c.bf16 %v463, %v463
      %v496 = vpack.c.bf16 %v464, %v464
      %v497 = vpack.c.bf16 %v465, %v465
      %v498 = vpack.c.bf16 %v466, %v466
      %v499 = vpack.c.bf16 %v467, %v467
      %v500 = vpack.c.bf16 %v468, %v468
      %v501 = vpack.c.bf16 %v469, %v469
      %v502 = vpack.c.bf16 %v470, %v470
      %v503 = vpack.c.bf16 %v471, %v471
      %v504 = vpack.c.bf16 %v472, %v472
      %v505 = vpack.c.bf16 %v473, %v473
      %v506 = vpack.c.bf16 %v474, %v474
      %v507 = vpack.c.bf16 %v475, %v475
      %v508 = vpack.c.bf16 %v476, %v476
      %v509 = vpack.c.bf16 %v477, %v477
      %v510 = vpack.c.bf16 %v478, %v478
      %v511 = vpack.c.bf16 %v479, %v479
      %v512 = vpack.c.bf16 %v480, %v480
      %v513 = vpack.c.bf16 %v481, %v481
      %v514 = vpack.c.bf16 %v482, %v482
      %v515 = vpack.c.bf16 %v483, %v483
      %v516 = vpack.c.bf16 %v484, %v484
      %vm517 = vcmask 60416
      %518 = vst.msk [vmem:[%s172] sm:$0xf] %vm517, %v485
      %519 = vst.msk [vmem:[%s172 + $0x4] sm:$0xf] %vm517, %v486
      %520 = vst.msk [vmem:[%s172 + $0x8] sm:$0xf] %vm517, %v487
      %521 = vst.msk [vmem:[%s172 + $0xc] sm:$0xf] %vm517, %v488
      %522 = vst.msk [vmem:[%s172 + $0x10] sm:$0xf] %vm517, %v489
      %523 = vst.msk [vmem:[%s172 + $0x14] sm:$0xf] %vm517, %v490
      %524 = vst.msk [vmem:[%s172 + $0x18] sm:$0xf] %vm517, %v491
      %525 = vst.msk [vmem:[%s172 + $0x1c] sm:$0xf] %vm517, %v492
      %526 = vst.msk [vmem:[%s172 + $0x20] sm:$0xf] %vm517, %v493
      %527 = vst.msk [vmem:[%s172 + $0x24] sm:$0xf] %vm517, %v494
      %528 = vst.msk [vmem:[%s172 + $0x28] sm:$0xf] %vm517, %v495
      %529 = vst.msk [vmem:[%s172 + $0x2c] sm:$0xf] %vm517, %v496
      %530 = vst.msk [vmem:[%s172 + $0x30] sm:$0xf] %vm517, %v497
      %531 = vst.msk [vmem:[%s172 + $0x34] sm:$0xf] %vm517, %v498
      %532 = vst.msk [vmem:[%s172 + $0x38] sm:$0xf] %vm517, %v499
      %533 = vst.msk [vmem:[%s172 + $0x3c] sm:$0xf] %vm517, %v500
      %534 = vst.msk [vmem:[%s172 + $0x40] sm:$0xf] %vm517, %v501
      %535 = vst.msk [vmem:[%s172 + $0x44] sm:$0xf] %vm517, %v502
      %536 = vst.msk [vmem:[%s172 + $0x48] sm:$0xf] %vm517, %v503
      %537 = vst.msk [vmem:[%s172 + $0x4c] sm:$0xf] %vm517, %v504
      %538 = vst.msk [vmem:[%s172 + $0x50] sm:$0xf] %vm517, %v505
      %539 = vst.msk [vmem:[%s172 + $0x54] sm:$0xf] %vm517, %v506
      %540 = vst.msk [vmem:[%s172 + $0x58] sm:$0xf] %vm517, %v507
      %541 = vst.msk [vmem:[%s172 + $0x5c] sm:$0xf] %vm517, %v508
      %542 = vst.msk [vmem:[%s172 + $0x60] sm:$0xf] %vm517, %v509
      %543 = vst.msk [vmem:[%s172 + $0x64] sm:$0xf] %vm517, %v510
      %544 = vst.msk [vmem:[%s172 + $0x68] sm:$0xf] %vm517, %v511
      %545 = vst.msk [vmem:[%s172 + $0x6c] sm:$0xf] %vm517, %v512
      %546 = vst.msk [vmem:[%s172 + $0x70] sm:$0xf] %vm517, %v513
      %547 = vst.msk [vmem:[%s172 + $0x74] sm:$0xf] %vm517, %v514
      %548 = vst.msk [vmem:[%s172 + $0x78] sm:$0xf] %vm517, %v515
      %549 = vst.msk [vmem:[%s172 + $0x7c] sm:$0xf] %vm517, %v516
      %s550 = smul.u32 32, %s14
      %p551 = scmp.lt.s32.totalorder %s550, 63
      %s552 = scalar_select %p551, %s550, 63
      %s553 = smul.addr %s552, 4
      %s554 = scalar_lea.vmem %s3, %s553
      // Predicated region
      $region33: #{_conv_group_nhwc.1} parent=31 // pred_check
        %p555 = pneg %p100
      $region34: #{_conv_group_nhwc.1} parent=31 // pred_check_branch
        %557 = sbr.rel (%p555) target = $region36
      $region35: #{_conv_group_nhwc.1} parent=31 // pred_region
        %s558 = smul.u32 32, %s14
      $region36: #{_conv_group_nhwc.1} parent=31 // pred_fallthru
        _
    $region32: #{_conv_group_nhwc.1} parent=5 // pred_fallthru
      _
    %p559 = scmp.le.s32.totalorder 2, %s9
    // Predicated region
    $region37: #{_conv_group_nhwc.1} parent=5 // pred_check
      %p560 = pneg %p559
    $region38: #{_conv_group_nhwc.1} parent=5 // pred_check_branch
      %562 = sbr.rel (%p560) target = $region40
    $region39: #{_conv_group_nhwc.1} parent=5 // pred_region
      %s563 = ssub.s32 %s9, 2
      // Predicated region
      $region41: #{_conv_group_nhwc.1} parent=39 // pred_check
        %p564 = pneg %p106
      $region42: #{_conv_group_nhwc.1} parent=39 // pred_check_branch
        %566 = sbr.rel (%p564) target = $region44
      $region43: #{_conv_group_nhwc.1} parent=39 // pred_region
        %s567 = smul.u32 32, %s15
        %p568 = scmp.lt.s32.totalorder %s567, 63
        %s569 = scalar_select %p568, %s567, 63
        %s570 = smul.addr %s569, 4
        %s571 = scalar_lea.vmem %s3, %s570
      $region44: #{_conv_group_nhwc.1} parent=39 // pred_fallthru
        _
    $region40: #{_conv_group_nhwc.1} parent=5 // pred_fallthru
      _
  $region6: #{_conv_group_nhwc.1} parent=0 // loop_footer
    %s13 = sadd.s32 1, %s9
  $region7: #{_conv_group_nhwc.1} parent=0 // loop_footer_branch
    %8 = sbr.rel target = $region3
  $region8: #{_conv_group_nhwc.1} parent=0 // loop_exit
    _

</llo_original>
